<compile_context>
chip_gen: v5e
topology: v5e:2x2
jax: 0.10.0
libtpu: 0.0.40
codegen_flags: <defaults>
</compile_context>

<pallas_src>
import jax
import jax.numpy as jnp
from jax.experimental import pallas as pl
from jax.experimental.pallas import tpu as pltpu


def _round_up(x, m):
    return (x + m - 1) // m * m


def _glcmnet_kernel(x1_ref, x2_ref,
                    wfc_ref, wg_ref, wf1_ref, wf2_ref, bias_ref,
                    out_ref):
    # x1/x2 arrive already in bf16 -> native MXU matmuls, f32 accumulation.
    b = bias_ref[...]            # (8,128) f32: row0=bfc, row1=bg, row2=bf
    bfc = b[0:1, :]
    bg = b[1:2, :]
    bf = b[2:3, :]

    # resnet18.fc : (TB,512) @ (512,128) + b -> (TB,128)  (lanes 100..127 = 0)
    h1 = jnp.dot(x1_ref[...], wfc_ref[...],
                 preferred_element_type=jnp.float32) + bfc
    # glcmnet     : (TB,600) @ (600,128) + b -> (TB,128)  (lanes 100..127 = 0)
    h2 = jnp.dot(x2_ref[...], wg_ref[...],
                 preferred_element_type=jnp.float32) + bg

    # finalLinear, concat-free: out = h1 @ Wf[:100] + h2 @ Wf[100:] + bf.
    out_ref[...] = (
        jnp.dot(h1.astype(jnp.bfloat16), wf1_ref[...],
                preferred_element_type=jnp.float32)
        + jnp.dot(h2.astype(jnp.bfloat16), wf2_ref[...],
                  preferred_element_type=jnp.float32)
        + bf)


def glcmnet_forward(x1_feat, x2, kernel_params, *, max_batch_tile=1024):
    """x1_feat: (B,512) f32 backbone features; x2: (B,600) f32 GLCM features."""
    wfc_p, wg_p, wf1_p, wf2_p, bias_p = kernel_params
    B = x1_feat.shape[0]

    # Batch tile: as large as allowed, but keep >=2 grid steps when B is big
    # enough so the "parallel" axis can shard across v7x's two TensorCores.
    Bp8 = _round_up(max(B, 8), 8)
    TB = min(max_batch_tile, Bp8)
    if Bp8 >= 16:
        TB = min(TB, _round_up((Bp8 + 1) // 2, 8))
    Bp = _round_up(B, TB)

    # bf16 cast in the wrapper (halves the activation DMA).  Batch padding is
    # only materialized when required, and then fuses with the cast.
    x1_b = x1_feat.astype(jnp.bfloat16)
    x2_b = x2.astype(jnp.bfloat16)
    if Bp != B:
        x1_b = jnp.zeros((Bp, 512), jnp.bfloat16).at[:B].set(x1_b)
        x2_b = jnp.zeros((Bp, 600), jnp.bfloat16).at[:B].set(x2_b)

    def resident(shape):  # weights/biases: same block every grid step
        return pl.BlockSpec(shape, lambda i: (0, 0))

    out = pl.pallas_call(
        _glcmnet_kernel,
        out_shape=jax.ShapeDtypeStruct((Bp, 128), jnp.float32),
        grid=(Bp // TB,),
        in_specs=[
            pl.BlockSpec((TB, 512), lambda i: (i, 0)),   # x1 tile streams (bf16)
            pl.BlockSpec((TB, 600), lambda i: (i, 0)),   # x2 tile streams (bf16)
            resident((512, 128)),                        # wfc (bf16)
            resident((600, 128)),                        # wg  (bf16)
            resident((128, 128)),                        # wf rows 0..99  (bf16)
            resident((128, 128)),                        # wf rows 100..199 (bf16)
            resident((8, 128)),                          # packed biases (f32)
        ],
        out_specs=pl.BlockSpec((TB, 128), lambda i: (i, 0)),
        compiler_params=pltpu.CompilerParams(
            dimension_semantics=("parallel",)),          # shard across v7x TCs
    )(x1_b, x2_b, wfc_p, wg_p, wf1_p, wf2_p, bias_p)

    return out[:B, :24]


def init_params(key):
    """Deterministic init mimicking torch.nn.Linear default U(-1/sqrt(fan_in), +)."""
    def linear(k, fan_in, fan_out):
        kw, kb = jax.random.split(k)
        bound = 1.0 / jnp.sqrt(jnp.float32(fan_in))
        w = jax.random.uniform(kw, (fan_in, fan_out), jnp.float32, -bound, bound)
        b = jax.random.uniform(kb, (1, fan_out), jnp.float32, -bound, bound)
        return w, b

    k1, k2, k3 = jax.random.split(key, 3)
    wfc, bfc = linear(k1, 512, 100)   # resnet18.fc: Linear(512, 100)
    wg, bg = linear(k2, 600, 100)     # glcmnet:     Linear(600, 100)
    wf, bf = linear(k3, 200, 24)      # finalLinear: Linear(200, 24)
    return wfc, bfc, wg, bg, wf, bf


def prepare_kernel_params(raw):
    """Zero-pad to lane-dense 128 outputs; weights bf16, biases packed f32."""
    wfc, bfc, wg, bg, wf, bf = raw

    wfc_p = (jnp.zeros((512, 128), jnp.float32)
             .at[:, :100].set(wfc).astype(jnp.bfloat16))
    wg_p = (jnp.zeros((600, 128), jnp.float32)
            .at[:, :100].set(wg).astype(jnp.bfloat16))
    # finalLinear split to match the (h1 | h2) layout: rows 0..99 of each
    # 128-row block hold the real weights, the rest are zero.
    wf1_p = (jnp.zeros((128, 128), jnp.float32)
             .at[:100, :24].set(wf[:100]).astype(jnp.bfloat16))
    wf2_p = (jnp.zeros((128, 128), jnp.float32)
             .at[:100, :24].set(wf[100:]).astype(jnp.bfloat16))
    # Packed biases: row0=bfc, row1=bg, row2=bf (f32, zero elsewhere).
    bias_p = jnp.zeros((8, 128), jnp.float32)
    bias_p = bias_p.at[0, :100].set(bfc[0])
    bias_p = bias_p.at[1, :100].set(bg[0])
    bias_p = bias_p.at[2, :24].set(bf[0])
    return wfc_p, wg_p, wf1_p, wf2_p, bias_p


def _reference(x1, x2, raw):
    """Pure-JAX reference with the same bf16 weight/activation quantization."""
    wfc, bfc, wg, bg, wf, bf = raw
    b16, f32 = jnp.bfloat16, jnp.float32
    h1 = jnp.dot(x1.astype(b16), wfc.astype(b16), preferred_element_type=f32) + bfc
    h2 = jnp.dot(x2.astype(b16), wg.astype(b16), preferred_element_type=f32) + bg
    h = jnp.concatenate([h1, h2], axis=1)
    return jnp.dot(h.astype(b16), wf.astype(b16), preferred_element_type=f32) + bf


if __name__ == "__main__":
    key = jax.random.PRNGKey(0)
    kp, kx1, kx2 = jax.random.split(key, 3)
    raw = init_params(kp)
    kparams = prepare_kernel_params(raw)

    B = 8
    # x1: 512-d resnet18 backbone features (conv backbone is a checkpoint load)
    x1_feat = jax.random.normal(kx1, (B, 512), jnp.float32)
    # x2: 600-d GLCM feature vector
    x2 = jax.random.normal(kx2, (B, 600), jnp.float32)

    out = glcmnet_forward(x1_feat, x2, kparams)
    out = jax.block_until_ready(out)

    ref = _reference(x1_feat, x2, raw)
    assert out.shape == (B, 24)
    assert jnp.allclose(out, ref, atol=2e-3, rtol=2e-3), (
        float(jnp.max(jnp.abs(out - ref))))
    print("KERNEL_OK")
</pallas_src>

<mosaic_0001>
module attributes {stable_mosaic.version = 11 : i64} {
  func.func @_glcmnet_kernel(%arg0: i32, %arg1: memref<8x512xbf16, #tpu.memory_space<vmem>>, %arg2: memref<8x600xbf16, #tpu.memory_space<vmem>>, %arg3: memref<512x128xbf16, #tpu.memory_space<vmem>>, %arg4: memref<600x128xbf16, #tpu.memory_space<vmem>>, %arg5: memref<128x128xbf16, #tpu.memory_space<vmem>>, %arg6: memref<128x128xbf16, #tpu.memory_space<vmem>>, %arg7: memref<8x128xf32, #tpu.memory_space<vmem>>, %arg8: memref<8x128xf32, #tpu.memory_space<vmem>>) attributes {dimension_semantics = [#tpu.dimension_semantics<parallel>], iteration_bounds = array<i64: 1>, scalar_prefetch = 0 : i64, scratch_operands = 0 : i64, tpu.core_type = #tpu.core_type<tc>, window_params = [{transform_indices = @transform_0, window_bounds = array<i64: 8, 512>}, {transform_indices = @transform_1, window_bounds = array<i64: 8, 600>}, {pipeline_mode = #tpu.pipeline_mode<synchronous>, transform_indices = @transform_2, window_bounds = array<i64: 512, 128>}, {pipeline_mode = #tpu.pipeline_mode<synchronous>, transform_indices = @transform_3, window_bounds = array<i64: 600, 128>}, {pipeline_mode = #tpu.pipeline_mode<synchronous>, transform_indices = @transform_4, window_bounds = array<i64: 128, 128>}, {pipeline_mode = #tpu.pipeline_mode<synchronous>, transform_indices = @transform_5, window_bounds = array<i64: 128, 128>}, {pipeline_mode = #tpu.pipeline_mode<synchronous>, transform_indices = @transform_6, window_bounds = array<i64: 8, 128>}, {transform_indices = @transform_7, window_bounds = array<i64: 8, 128>}]} {
    %c0 = arith.constant 0 : index
    %c0_0 = arith.constant 0 : index
    %0 = vector.load %arg7[%c0, %c0_0] : memref<8x128xf32, #tpu.memory_space<vmem>>, vector<8x128xf32>
    %1 = vector.extract_strided_slice %0 {offsets = [0, 0], sizes = [1, 128], strides = [1, 1]} : vector<8x128xf32> to vector<1x128xf32>
    %2 = vector.extract_strided_slice %0 {offsets = [1, 0], sizes = [1, 128], strides = [1, 1]} : vector<8x128xf32> to vector<1x128xf32>
    %3 = vector.extract_strided_slice %0 {offsets = [2, 0], sizes = [1, 128], strides = [1, 1]} : vector<8x128xf32> to vector<1x128xf32>
    %c0_1 = arith.constant 0 : index
    %c0_2 = arith.constant 0 : index
    %4 = vector.load %arg1[%c0_1, %c0_2] : memref<8x512xbf16, #tpu.memory_space<vmem>>, vector<8x512xbf16>
    %c0_3 = arith.constant 0 : index
    %c0_4 = arith.constant 0 : index
    %5 = vector.load %arg3[%c0_3, %c0_4] : memref<512x128xbf16, #tpu.memory_space<vmem>>, vector<512x128xbf16>
    %cst = arith.constant dense<0.000000e+00> : vector<8x128xf32>
    %6 = tpu.matmul %4, %5, %cst {dimension_numbers = #tpu.dot_dimension_numbers<[1], [0], [0], [1], [0, 0, 1, 1], [], []>} : vector<8x512xbf16>, vector<512x128xbf16>, vector<8x128xf32> -> vector<8x128xf32>
    %7 = vector.broadcast %1 : vector<1x128xf32> to vector<8x128xf32>
    %8 = arith.addf %6, %7 : vector<8x128xf32>
    %c0_5 = arith.constant 0 : index
    %c0_6 = arith.constant 0 : index
    %9 = vector.load %arg2[%c0_5, %c0_6] : memref<8x600xbf16, #tpu.memory_space<vmem>>, vector<8x600xbf16>
    %c0_7 = arith.constant 0 : index
    %c0_8 = arith.constant 0 : index
    %10 = vector.load %arg4[%c0_7, %c0_8] : memref<600x128xbf16, #tpu.memory_space<vmem>>, vector<600x128xbf16>
    %cst_9 = arith.constant dense<0.000000e+00> : vector<8x128xf32>
    %11 = tpu.matmul %9, %10, %cst_9 {dimension_numbers = #tpu.dot_dimension_numbers<[1], [0], [0], [1], [0, 0, 1, 1], [], []>} : vector<8x600xbf16>, vector<600x128xbf16>, vector<8x128xf32> -> vector<8x128xf32>
    %12 = vector.broadcast %2 : vector<1x128xf32> to vector<8x128xf32>
    %13 = arith.addf %11, %12 : vector<8x128xf32>
    %14 = arith.truncf %8 : vector<8x128xf32> to vector<8x128xbf16>
    %c0_10 = arith.constant 0 : index
    %c0_11 = arith.constant 0 : index
    %15 = vector.load %arg5[%c0_10, %c0_11] : memref<128x128xbf16, #tpu.memory_space<vmem>>, vector<128x128xbf16>
    %cst_12 = arith.constant dense<0.000000e+00> : vector<8x128xf32>
    %16 = tpu.matmul %14, %15, %cst_12 {dimension_numbers = #tpu.dot_dimension_numbers<[1], [0], [0], [1], [0, 0, 1, 1], [], []>} : vector<8x128xbf16>, vector<128x128xbf16>, vector<8x128xf32> -> vector<8x128xf32>
    %17 = arith.truncf %13 : vector<8x128xf32> to vector<8x128xbf16>
    %c0_13 = arith.constant 0 : index
    %c0_14 = arith.constant 0 : index
    %18 = vector.load %arg6[%c0_13, %c0_14] : memref<128x128xbf16, #tpu.memory_space<vmem>>, vector<128x128xbf16>
    %cst_15 = arith.constant dense<0.000000e+00> : vector<8x128xf32>
    %19 = tpu.matmul %17, %18, %cst_15 {dimension_numbers = #tpu.dot_dimension_numbers<[1], [0], [0], [1], [0, 0, 1, 1], [], []>} : vector<8x128xbf16>, vector<128x128xbf16>, vector<8x128xf32> -> vector<8x128xf32>
    %20 = arith.addf %16, %19 : vector<8x128xf32>
    %21 = vector.broadcast %3 : vector<1x128xf32> to vector<8x128xf32>
    %22 = arith.addf %20, %21 : vector<8x128xf32>
    %c0_16 = arith.constant 0 : index
    %c0_17 = arith.constant 0 : index
    %23 = vector.load %arg8[%c0_16, %c0_17] : memref<8x128xf32, #tpu.memory_space<vmem>>, vector<8x128xf32>
    tpu.vector_store %arg8[%c0_16, %c0_17], %22 {strides = array<i32>} : memref<8x128xf32, #tpu.memory_space<vmem>>, vector<8x128xf32>,
    return
  }
  func.func @transform_0(%arg0: i32) -> (i32, i32) {
    %c0_i32 = arith.constant 0 : i32
    %c0_i32_0 = arith.constant 0 : i32
    return %arg0, %c0_i32 : i32, i32
  }
  func.func @transform_1(%arg0: i32) -> (i32, i32) {
    %c0_i32 = arith.constant 0 : i32
    %c0_i32_0 = arith.constant 0 : i32
    return %arg0, %c0_i32 : i32, i32
  }
  func.func @transform_2(%arg0: i32) -> (i32, i32) {
    %c0_i32 = arith.constant 0 : i32
    %c0_i32_0 = arith.constant 0 : i32
    %c0_i32_1 = arith.constant 0 : i32
    return %c0_i32, %c0_i32_0 : i32, i32
  }
  func.func @transform_3(%arg0: i32) -> (i32, i32) {
    %c0_i32 = arith.constant 0 : i32
    %c0_i32_0 = arith.constant 0 : i32
    %c0_i32_1 = arith.constant 0 : i32
    return %c0_i32, %c0_i32_0 : i32, i32
  }
  func.func @transform_4(%arg0: i32) -> (i32, i32) {
    %c0_i32 = arith.constant 0 : i32
    %c0_i32_0 = arith.constant 0 : i32
    %c0_i32_1 = arith.constant 0 : i32
    return %c0_i32, %c0_i32_0 : i32, i32
  }
  func.func @transform_5(%arg0: i32) -> (i32, i32) {
    %c0_i32 = arith.constant 0 : i32
    %c0_i32_0 = arith.constant 0 : i32
    %c0_i32_1 = arith.constant 0 : i32
    return %c0_i32, %c0_i32_0 : i32, i32
  }
  func.func @transform_6(%arg0: i32) -> (i32, i32) {
    %c0_i32 = arith.constant 0 : i32
    %c0_i32_0 = arith.constant 0 : i32
    %c0_i32_1 = arith.constant 0 : i32
    return %c0_i32, %c0_i32_0 : i32, i32
  }
  func.func @transform_7(%arg0: i32) -> (i32, i32) {
    %c0_i32 = arith.constant 0 : i32
    %c0_i32_0 = arith.constant 0 : i32
    return %arg0, %c0_i32 : i32, i32
  }
}

</mosaic_0001>

<llo_original>
// kernel: tpu_custom_call.1
$region0: #{tpu_custom_call.1}
  #allocation0 [shape = 'u32[]', space=smem, size = 0x4, offset = 0x4, fixed_abs, tag = 'smem constant byte address 0x4 - core index']
  #allocation1 [shape = 'u32[72,128]{1,0:T(1,128)}', space=vmem, size = 0x9000, scoped, tag = 'internal scratch']
  %s0 = inlined_call_operand.hbm [shape: bf16[8,512], index: 0, kind: input, shape index: {}]
  %s1 = inlined_call_operand.hbm [shape: bf16[8,600], index: 1, kind: input, shape index: {}]
  %s2 = inlined_call_operand.hbm [shape: bf16[512,128], index: 2, kind: input, shape index: {}]
  %s3 = inlined_call_operand.hbm [shape: bf16[600,128], index: 3, kind: input, shape index: {}]
  %s4 = inlined_call_operand.hbm [shape: bf16[128,128], index: 4, kind: input, shape index: {}]
  %s5 = inlined_call_operand.hbm [shape: bf16[128,128], index: 5, kind: input, shape index: {}]
  %s6 = inlined_call_operand.hbm [shape: f32[8,128], index: 6, kind: input, shape index: {}]
  %s7 = inlined_call_operand.hbm [shape: f32[8,128], index: 7, kind: output, shape index: {}]
  %s8 = sld [smem:[#allocation0]]
  $region66: #{tpu_custom_call.1} parent=0
    _
  %s10 = ssub.s32 1, %s8
  %s11 = scalar_select 0, %s10, %s8
  $region1: #{tpu_custom_call.1} parent=0
    #allocation2 [shape = 'u8[8192]{0}', space=vmem, size = 0x2000, scoped, tag = 'input window, operand 0, single buffered']
    #allocation3 [shape = 's32[1]{0}', space=sflag, size = 0x4, scoped, tag = 'scoped memory for tpu_custom_call.1']
    #allocation4 [shape = 's32[1]{0}', space=sflag, size = 0x4, scoped, tag = 'scoped memory for tpu_custom_call.1']
    #allocation5 [shape = 'u8[10240]{0}', space=vmem, size = 0x2800, scoped, tag = 'input window, operand 1, single buffered']
    #allocation6 [shape = 's32[1]{0}', space=sflag, size = 0x4, scoped, tag = 'scoped memory for tpu_custom_call.1']
    #allocation7 [shape = 'u8[131072]{0}', space=vmem, size = 0x20000, scoped, tag = 'input window, operand 2, single buffered']
    #allocation8 [shape = 'u8[153600]{0}', space=vmem, size = 0x25800, scoped, tag = 'input window, operand 3, single buffered']
    #allocation9 [shape = 's32[1]{0}', space=sflag, size = 0x4, scoped, tag = 'scoped memory for tpu_custom_call.1']
    #allocation10 [shape = 'u8[32768]{0}', space=vmem, size = 0x8000, scoped, tag = 'input window, operand 4, single buffered']
    #allocation11 [shape = 'u8[32768]{0}', space=vmem, size = 0x8000, scoped, tag = 'input window, operand 5, single buffered']
    #allocation12 [shape = 's32[1]{0}', space=sflag, size = 0x4, scoped, tag = 'scoped memory for tpu_custom_call.1']
    #allocation13 [shape = 'u8[4096]{0}', space=vmem, size = 0x1000, scoped, tag = 'input window, operand 6, single buffered']
    #allocation14 [shape = 'u8[4096]{0}', space=vmem, size = 0x1000, scoped, tag = 'output window, operand 0, single buffered']
    %12 = vsyncpa [#allocation3], 0
    %13 = vsyncpa [#allocation6], 0
    %14 = vsyncpa [#allocation9], 0
    %15 = vsyncpa [#allocation12], 0
    %16 = vsyncpa [#allocation4], 0
    // Predicated region
    $region2: #{tpu_custom_call.1} parent=1 // pred_check
      _
    $region3: #{tpu_custom_call.1} parent=1 // pred_check_branch
      %18 = sbr.rel (0) target = $region5
    $region4: #{tpu_custom_call.1} parent=1 // pred_region
      %20 = vsyncadd [#allocation3], 0
      %s22 = sshll.u32 %s0, 4
      %s23 = int_to_ptr.hbm [resolvable:$true] %s22
      %s24 = sshll.u32 [#allocation2], 4
      %s25 = int_to_ptr.vmem [resolvable:$true] %s24
      %27 = dma.hbm_to_vmem [thread:$0]  %s23, 256, %s25, [#allocation3]
    $region5: #{tpu_custom_call.1} parent=1 // pred_fallthru
      _
    // Predicated region
    $region6: #{tpu_custom_call.1} parent=1 // pred_check
      _
    $region7: #{tpu_custom_call.1} parent=1 // pred_check_branch
      %29 = sbr.rel (0) target = $region9
    $region8: #{tpu_custom_call.1} parent=1 // pred_region
      %31 = vsyncadd [#allocation6], 0
      %s33 = sshll.u32 %s1, 4
      %s34 = int_to_ptr.hbm [resolvable:$true] %s33
      %s35 = sshll.u32 [#allocation5], 4
      %s36 = int_to_ptr.vmem [resolvable:$true] %s35
      %38 = dma.hbm_to_vmem [thread:$0]  %s34, 320, %s36, [#allocation6]
    $region9: #{tpu_custom_call.1} parent=1 // pred_fallthru
      _
    // Predicated region
    $region10: #{tpu_custom_call.1} parent=1 // pred_check
      _
    $region11: #{tpu_custom_call.1} parent=1 // pred_check_branch
      %40 = sbr.rel (0) target = $region13
    $region12: #{tpu_custom_call.1} parent=1 // pred_region
      %42 = vsyncadd [#allocation6], 0
      %s43 = sshll.u32 %s2, 4
      %s44 = int_to_ptr.hbm [resolvable:$true] %s43
      %s45 = sshll.u32 [#allocation7], 4
      %s46 = int_to_ptr.vmem [resolvable:$true] %s45
      %51 = dma.hbm_to_vmem [thread:$0]  %s44, 4096, %s46, [#allocation6], 64, 64, 4
    $region13: #{tpu_custom_call.1} parent=1 // pred_fallthru
      _
    // Predicated region
    $region14: #{tpu_custom_call.1} parent=1 // pred_check
      _
    $region15: #{tpu_custom_call.1} parent=1 // pred_check_branch
      %53 = sbr.rel (0) target = $region17
    $region16: #{tpu_custom_call.1} parent=1 // pred_region
      %55 = vsyncadd [#allocation9], 0
      %s56 = sshll.u32 %s3, 4
      %s57 = int_to_ptr.hbm [resolvable:$true] %s56
      %s58 = sshll.u32 [#allocation8], 4
      %s59 = int_to_ptr.vmem [resolvable:$true] %s58
      %64 = dma.hbm_to_vmem [thread:$0]  %s57, 4800, %s59, [#allocation9], 64, 64, 4
    $region17: #{tpu_custom_call.1} parent=1 // pred_fallthru
      _
    // Predicated region
    $region18: #{tpu_custom_call.1} parent=1 // pred_check
      _
    $region19: #{tpu_custom_call.1} parent=1 // pred_check_branch
      %66 = sbr.rel (0) target = $region21
    $region20: #{tpu_custom_call.1} parent=1 // pred_region
      %68 = vsyncadd [#allocation9], 0
      %s69 = sshll.u32 %s4, 4
      %s70 = int_to_ptr.hbm [resolvable:$true] %s69
      %s71 = sshll.u32 [#allocation10], 4
      %s72 = int_to_ptr.vmem [resolvable:$true] %s71
      %77 = dma.hbm_to_vmem [thread:$0]  %s70, 1024, %s72, [#allocation9], 64, 64, 4
    $region21: #{tpu_custom_call.1} parent=1 // pred_fallthru
      _
    // Predicated region
    $region22: #{tpu_custom_call.1} parent=1 // pred_check
      _
    $region23: #{tpu_custom_call.1} parent=1 // pred_check_branch
      %79 = sbr.rel (0) target = $region25
    $region24: #{tpu_custom_call.1} parent=1 // pred_region
      %81 = vsyncadd [#allocation12], 0
      %s82 = sshll.u32 %s5, 4
      %s83 = int_to_ptr.hbm [resolvable:$true] %s82
      %s84 = sshll.u32 [#allocation11], 4
      %s85 = int_to_ptr.vmem [resolvable:$true] %s84
      %90 = dma.hbm_to_vmem [thread:$0]  %s83, 1024, %s85, [#allocation12], 64, 64, 4
    $region25: #{tpu_custom_call.1} parent=1 // pred_fallthru
      _
    // Predicated region
    $region26: #{tpu_custom_call.1} parent=1 // pred_check
      _
    $region27: #{tpu_custom_call.1} parent=1 // pred_check_branch
      %92 = sbr.rel (0) target = $region29
    $region28: #{tpu_custom_call.1} parent=1 // pred_region
      %94 = vsyncadd [#allocation12], 0
      %s96 = sshll.u32 %s6, 4
      %s97 = int_to_ptr.hbm [resolvable:$true] %s96
      %s98 = sshll.u32 [#allocation13], 4
      %s99 = int_to_ptr.vmem [resolvable:$true] %s98
      %101 = dma.hbm_to_vmem [thread:$0]  %s97, 128, %s99, [#allocation12]
    $region29: #{tpu_custom_call.1} parent=1 // pred_fallthru
      _
    // Predicated region
    $region30: #{tpu_custom_call.1} parent=1 // pred_check
      _
    $region31: #{tpu_custom_call.1} parent=1 // pred_check_branch
      %103 = sbr.rel (0) target = $region33
    $region32: #{tpu_custom_call.1} parent=1 // pred_region
      %105 = dma.done [#allocation3], 256
    $region33: #{tpu_custom_call.1} parent=1 // pred_fallthru
      _
    // Predicated region
    $region34: #{tpu_custom_call.1} parent=1 // pred_check
      _
    $region35: #{tpu_custom_call.1} parent=1 // pred_check_branch
      %107 = sbr.rel (0) target = $region37
    $region36: #{tpu_custom_call.1} parent=1 // pred_region
      %109 = dma.done [#allocation6], 320
    $region37: #{tpu_custom_call.1} parent=1 // pred_fallthru
      _
    // Predicated region
    $region38: #{tpu_custom_call.1} parent=1 // pred_check
      _
    $region39: #{tpu_custom_call.1} parent=1 // pred_check_branch
      %111 = sbr.rel (0) target = $region41
    $region40: #{tpu_custom_call.1} parent=1 // pred_region
      %113 = dma.done [#allocation6], 4096
    $region41: #{tpu_custom_call.1} parent=1 // pred_fallthru
      _
    // Predicated region
    $region42: #{tpu_custom_call.1} parent=1 // pred_check
      _
    $region43: #{tpu_custom_call.1} parent=1 // pred_check_branch
      %115 = sbr.rel (0) target = $region45
    $region44: #{tpu_custom_call.1} parent=1 // pred_region
      %117 = dma.done [#allocation9], 4800
    $region45: #{tpu_custom_call.1} parent=1 // pred_fallthru
      _
    // Predicated region
    $region46: #{tpu_custom_call.1} parent=1 // pred_check
      _
    $region47: #{tpu_custom_call.1} parent=1 // pred_check_branch
      %119 = sbr.rel (0) target = $region49
    $region48: #{tpu_custom_call.1} parent=1 // pred_region
      %121 = dma.done [#allocation9], 1024
    $region49: #{tpu_custom_call.1} parent=1 // pred_fallthru
      _
    // Predicated region
    $region50: #{tpu_custom_call.1} parent=1 // pred_check
      _
    $region51: #{tpu_custom_call.1} parent=1 // pred_check_branch
      %123 = sbr.rel (0) target = $region53
    $region52: #{tpu_custom_call.1} parent=1 // pred_region
      %125 = dma.done [#allocation12], 1024
    $region53: #{tpu_custom_call.1} parent=1 // pred_fallthru
      _
    // Predicated region
    $region54: #{tpu_custom_call.1} parent=1 // pred_check
      _
    $region55: #{tpu_custom_call.1} parent=1 // pred_check_branch
      %127 = sbr.rel (0) target = $region57
    $region56: #{tpu_custom_call.1} parent=1 // pred_region
      %129 = dma.done [#allocation12], 128
    $region57: #{tpu_custom_call.1} parent=1 // pred_fallthru
      _
    %v131 = vld [vmem:[#allocation13] sm:$0xff]
    %v132 = vld [vmem:[#allocation2] sm:$0xff]
    %v133 = vld [vmem:[#allocation2 + $0x8] sm:$0xff]
    %v134 = vld [vmem:[#allocation7] sm:$0xf]
    %v135 = vld [vmem:[#allocation7 + $0x4] sm:$0xf]
    %v136 = vld [vmem:[#allocation7 + $0x8] sm:$0xf]
    %v137 = vld [vmem:[#allocation7 + $0xc] sm:$0xf]
    %v138 = vld [vmem:[#allocation7 + $0x10] sm:$0xf]
    %v139 = vld [vmem:[#allocation7 + $0x14] sm:$0xf]
    %v140 = vld [vmem:[#allocation7 + $0x18] sm:$0xf]
    %v141 = vld [vmem:[#allocation7 + $0x1c] sm:$0xf]
    %v142 = vld [vmem:[#allocation7 + $0x20] sm:$0xf]
    %v143 = vld [vmem:[#allocation7 + $0x24] sm:$0xf]
    %v144 = vld [vmem:[#allocation7 + $0x28] sm:$0xf]
    %v145 = vld [vmem:[#allocation7 + $0x2c] sm:$0xf]
    %v146 = vld [vmem:[#allocation7 + $0x30] sm:$0xf]
    %v147 = vld [vmem:[#allocation7 + $0x34] sm:$0xf]
    %v148 = vld [vmem:[#allocation7 + $0x38] sm:$0xf]
    %v149 = vld [vmem:[#allocation7 + $0x3c] sm:$0xf]
    %v150 = vld [vmem:[#allocation7 + $0x40] sm:$0xf]
    %v151 = vld [vmem:[#allocation7 + $0x44] sm:$0xf]
    %v152 = vld [vmem:[#allocation7 + $0x48] sm:$0xf]
    %v153 = vld [vmem:[#allocation7 + $0x4c] sm:$0xf]
    %v154 = vld [vmem:[#allocation7 + $0x50] sm:$0xf]
    %v155 = vld [vmem:[#allocation7 + $0x54] sm:$0xf]
    %v156 = vld [vmem:[#allocation7 + $0x58] sm:$0xf]
    %v157 = vld [vmem:[#allocation7 + $0x5c] sm:$0xf]
    %v158 = vld [vmem:[#allocation7 + $0x60] sm:$0xf]
    %v159 = vld [vmem:[#allocation7 + $0x64] sm:$0xf]
    %v160 = vld [vmem:[#allocation7 + $0x68] sm:$0xf]
    %v161 = vld [vmem:[#allocation7 + $0x6c] sm:$0xf]
    %v162 = vld [vmem:[#allocation7 + $0x70] sm:$0xf]
    %v163 = vld [vmem:[#allocation7 + $0x74] sm:$0xf]
    %v164 = vld [vmem:[#allocation7 + $0x78] sm:$0xf]
    %v165 = vld [vmem:[#allocation7 + $0x7c] sm:$0xf]
    %v166 = vld [vmem:[#allocation7 + $0x80] sm:$0xf]
    %v167 = vld [vmem:[#allocation7 + $0x84] sm:$0xf]
    %v168 = vld [vmem:[#allocation7 + $0x88] sm:$0xf]
    %v169 = vld [vmem:[#allocation7 + $0x8c] sm:$0xf]
    %v170 = vld [vmem:[#allocation7 + $0x90] sm:$0xf]
    %v171 = vld [vmem:[#allocation7 + $0x94] sm:$0xf]
    %v172 = vld [vmem:[#allocation7 + $0x98] sm:$0xf]
    %v173 = vld [vmem:[#allocation7 + $0x9c] sm:$0xf]
    %v174 = vld [vmem:[#allocation7 + $0xa0] sm:$0xf]
    %v175 = vld [vmem:[#allocation7 + $0xa4] sm:$0xf]
    %v176 = vld [vmem:[#allocation7 + $0xa8] sm:$0xf]
    %v177 = vld [vmem:[#allocation7 + $0xac] sm:$0xf]
    %v178 = vld [vmem:[#allocation7 + $0xb0] sm:$0xf]
    %v179 = vld [vmem:[#allocation7 + $0xb4] sm:$0xf]
    %v180 = vld [vmem:[#allocation7 + $0xb8] sm:$0xf]
    %v181 = vld [vmem:[#allocation7 + $0xbc] sm:$0xf]
    %v182 = vld [vmem:[#allocation7 + $0xc0] sm:$0xf]
    %v183 = vld [vmem:[#allocation7 + $0xc4] sm:$0xf]
    %v184 = vld [vmem:[#allocation7 + $0xc8] sm:$0xf]
    %v185 = vld [vmem:[#allocation7 + $0xcc] sm:$0xf]
    %v186 = vld [vmem:[#allocation7 + $0xd0] sm:$0xf]
    %v187 = vld [vmem:[#allocation7 + $0xd4] sm:$0xf]
    %v188 = vld [vmem:[#allocation7 + $0xd8] sm:$0xf]
    %v189 = vld [vmem:[#allocation7 + $0xdc] sm:$0xf]
    %v190 = vld [vmem:[#allocation7 + $0xe0] sm:$0xf]
    %v191 = vld [vmem:[#allocation7 + $0xe4] sm:$0xf]
    %v192 = vld [vmem:[#allocation7 + $0xe8] sm:$0xf]
    %v193 = vld [vmem:[#allocation7 + $0xec] sm:$0xf]
    %v194 = vld [vmem:[#allocation7 + $0xf0] sm:$0xf]
    %v195 = vld [vmem:[#allocation7 + $0xf4] sm:$0xf]
    %v196 = vld [vmem:[#allocation7 + $0xf8] sm:$0xf]
    %v197 = vld [vmem:[#allocation7 + $0xfc] sm:$0xf]
    %v198 = vperm.slane %v131, 0
    %v201 = vunpack.c.l.b16 %v132
    %v202 = vunpack.c.h.b16 %v132
    %v203 = vunpack.c.l.b16 %v133
    %v204 = vunpack.c.h.b16 %v133
    %v205 = vpack.c.b16 %v201, %v201
    %v206 = vpack.c.b16 %v202, %v202
    %v207 = vpack.c.b16 %v203, %v203
    %v208 = vpack.c.b16 %v204, %v204
    %v277 = vunpack.c.l.b16 %v134
    %v278 = vunpack.c.l.b16 %v135
    %v279 = vunpack.c.l.b16 %v136
    %v280 = vunpack.c.l.b16 %v137
    %v281 = vunpack.c.l.b16 %v138
    %v282 = vunpack.c.l.b16 %v139
    %v283 = vunpack.c.l.b16 %v140
    %v284 = vunpack.c.l.b16 %v141
    %v285 = vunpack.c.l.b16 %v142
    %v286 = vunpack.c.l.b16 %v143
    %v287 = vunpack.c.l.b16 %v144
    %v288 = vunpack.c.l.b16 %v145
    %v289 = vunpack.c.l.b16 %v146
    %v290 = vunpack.c.l.b16 %v147
    %v291 = vunpack.c.l.b16 %v148
    %v292 = vunpack.c.l.b16 %v149
    %v293 = vunpack.c.l.b16 %v150
    %v294 = vunpack.c.l.b16 %v151
    %v295 = vunpack.c.l.b16 %v152
    %v296 = vunpack.c.l.b16 %v153
    %v297 = vunpack.c.l.b16 %v154
    %v298 = vunpack.c.l.b16 %v155
    %v299 = vunpack.c.l.b16 %v156
    %v300 = vunpack.c.l.b16 %v157
    %v301 = vunpack.c.l.b16 %v158
    %v302 = vunpack.c.l.b16 %v159
    %v303 = vunpack.c.l.b16 %v160
    %v304 = vunpack.c.l.b16 %v161
    %v305 = vunpack.c.l.b16 %v162
    %v306 = vunpack.c.l.b16 %v163
    %v307 = vunpack.c.l.b16 %v164
    %v308 = vunpack.c.l.b16 %v165
    %v309 = vunpack.c.l.b16 %v166
    %v310 = vunpack.c.l.b16 %v167
    %v311 = vunpack.c.l.b16 %v168
    %v312 = vunpack.c.l.b16 %v169
    %v313 = vunpack.c.l.b16 %v170
    %v314 = vunpack.c.l.b16 %v171
    %v315 = vunpack.c.l.b16 %v172
    %v316 = vunpack.c.l.b16 %v173
    %v317 = vunpack.c.l.b16 %v174
    %v318 = vunpack.c.l.b16 %v175
    %v319 = vunpack.c.l.b16 %v176
    %v320 = vunpack.c.l.b16 %v177
    %v321 = vunpack.c.l.b16 %v178
    %v322 = vunpack.c.l.b16 %v179
    %v323 = vunpack.c.l.b16 %v180
    %v324 = vunpack.c.l.b16 %v181
    %v325 = vunpack.c.l.b16 %v182
    %v326 = vunpack.c.l.b16 %v183
    %v327 = vunpack.c.l.b16 %v184
    %v328 = vunpack.c.l.b16 %v185
    %v329 = vunpack.c.l.b16 %v186
    %v330 = vunpack.c.l.b16 %v187
    %v331 = vunpack.c.l.b16 %v188
    %v332 = vunpack.c.l.b16 %v189
    %v333 = vunpack.c.l.b16 %v190
    %v334 = vunpack.c.l.b16 %v191
    %v335 = vunpack.c.l.b16 %v192
    %v336 = vunpack.c.l.b16 %v193
    %v337 = vunpack.c.l.b16 %v194
    %v338 = vunpack.c.l.b16 %v195
    %v339 = vunpack.c.l.b16 %v196
    %v340 = vunpack.c.l.b16 %v197
    %v341 = vpack.c.b16 %v278, %v277
    %v342 = vpack.c.b16 %v280, %v279
    %v343 = vpack.c.b16 %v282, %v281
    %v344 = vpack.c.b16 %v284, %v283
    %v345 = vpack.c.b16 %v286, %v285
    %v346 = vpack.c.b16 %v288, %v287
    %v347 = vpack.c.b16 %v290, %v289
    %v348 = vpack.c.b16 %v292, %v291
    %v349 = vpack.c.b16 %v294, %v293
    %v350 = vpack.c.b16 %v296, %v295
    %v351 = vpack.c.b16 %v298, %v297
    %v352 = vpack.c.b16 %v300, %v299
    %v353 = vpack.c.b16 %v302, %v301
    %v354 = vpack.c.b16 %v304, %v303
    %v355 = vpack.c.b16 %v306, %v305
    %v356 = vpack.c.b16 %v308, %v307
    %v357 = vpack.c.b16 %v310, %v309
    %v358 = vpack.c.b16 %v312, %v311
    %v359 = vpack.c.b16 %v314, %v313
    %v360 = vpack.c.b16 %v316, %v315
    %v361 = vpack.c.b16 %v318, %v317
    %v362 = vpack.c.b16 %v320, %v319
    %v363 = vpack.c.b16 %v322, %v321
    %v364 = vpack.c.b16 %v324, %v323
    %v365 = vpack.c.b16 %v326, %v325
    %v366 = vpack.c.b16 %v328, %v327
    %v367 = vpack.c.b16 %v330, %v329
    %v368 = vpack.c.b16 %v332, %v331
    %v369 = vpack.c.b16 %v334, %v333
    %v370 = vpack.c.b16 %v336, %v335
    %v371 = vpack.c.b16 %v338, %v337
    %v372 = vpack.c.b16 %v340, %v339
    %405 = vmatpush.bf16.msra.mxu0 %v348
    %406 = vmatpush.bf16.msra.mxu0 %v347
    %407 = vmatpush.bf16.msra.mxu0 %v346
    %408 = vmatpush.bf16.msra.mxu0 %v345
    %409 = vmatpush.bf16.msra.mxu0 %v344
    %410 = vmatpush.bf16.msra.mxu0 %v343
    %411 = vmatpush.bf16.msra.mxu0 %v342
    %412 = vmatpush.bf16.msra.mxu0 %v341
    %413 = vmatmul.bf16.gmra.mxu0 %v205
    %v414 = vpop.f32.mrf.mxu0
    %v415 = vadd.f32 %v198, %v414
    %v416 = vpop.f32.mrf.mxu0
    %417 = vdwg.mxu0
    %418 = vmatpush.bf16.msra.mxu0 %v356
    %419 = vmatpush.bf16.msra.mxu0 %v355
    %420 = vmatpush.bf16.msra.mxu0 %v354
    %421 = vmatpush.bf16.msra.mxu0 %v353
    %422 = vmatpush.bf16.msra.mxu0 %v352
    %423 = vmatpush.bf16.msra.mxu0 %v351
    %424 = vmatpush.bf16.msra.mxu0 %v350
    %425 = vmatpush.bf16.msra.mxu0 %v349
    %426 = vmatmul.bf16.gmra.mxu0 %v206
    %v427 = vpop.f32.mrf.mxu0
    %v428 = vadd.f32 %v415, %v427
    %v429 = vpop.f32.mrf.mxu0
    %430 = vdwg.mxu0
    %431 = vmatpush.bf16.msra.mxu0 %v364
    %432 = vmatpush.bf16.msra.mxu0 %v363
    %433 = vmatpush.bf16.msra.mxu0 %v362
    %434 = vmatpush.bf16.msra.mxu0 %v361
    %435 = vmatpush.bf16.msra.mxu0 %v360
    %436 = vmatpush.bf16.msra.mxu0 %v359
    %437 = vmatpush.bf16.msra.mxu0 %v358
    %438 = vmatpush.bf16.msra.mxu0 %v357
    %439 = vmatmul.bf16.gmra.mxu0 %v207
    %v440 = vpop.f32.mrf.mxu0
    %v441 = vadd.f32 %v428, %v440
    %v442 = vpop.f32.mrf.mxu0
    %443 = vdwg.mxu0
    %444 = vmatpush.bf16.msra.mxu0 %v372
    %445 = vmatpush.bf16.msra.mxu0 %v371
    %446 = vmatpush.bf16.msra.mxu0 %v370
    %447 = vmatpush.bf16.msra.mxu0 %v369
    %448 = vmatpush.bf16.msra.mxu0 %v368
    %449 = vmatpush.bf16.msra.mxu0 %v367
    %450 = vmatpush.bf16.msra.mxu0 %v366
    %451 = vmatpush.bf16.msra.mxu0 %v365
    %452 = vmatmul.bf16.gmra.mxu0 %v208
    %v453 = vpop.f32.mrf.mxu0
    %v454 = vadd.f32 %v441, %v453
    %v455 = vpop.f32.mrf.mxu0
    %456 = vdwg.mxu0
    %v457 = vld [vmem:[#allocation5] sm:$0xff]
    %v458 = vld [vmem:[#allocation5 + $0x8] sm:$0xff]
    %v459 = vld [vmem:[#allocation5 + $0x10] sm:$0xf]
    %v460 = vld [vmem:[#allocation8] sm:$0xf]
    %v461 = vld [vmem:[#allocation8 + $0x4] sm:$0xf]
    %v462 = vld [vmem:[#allocation8 + $0x8] sm:$0xf]
    %v463 = vld [vmem:[#allocation8 + $0xc] sm:$0xf]
    %v464 = vld [vmem:[#allocation8 + $0x10] sm:$0xf]
    %v465 = vld [vmem:[#allocation8 + $0x14] sm:$0xf]
    %v466 = vld [vmem:[#allocation8 + $0x18] sm:$0xf]
    %v467 = vld [vmem:[#allocation8 + $0x1c] sm:$0xf]
    %v468 = vld [vmem:[#allocation8 + $0x20] sm:$0xf]
    %v469 = vld [vmem:[#allocation8 + $0x24] sm:$0xf]
    %v470 = vld [vmem:[#allocation8 + $0x28] sm:$0xf]
    %v471 = vld [vmem:[#allocation8 + $0x2c] sm:$0xf]
    %v472 = vld [vmem:[#allocation8 + $0x30] sm:$0xf]
    %v473 = vld [vmem:[#allocation8 + $0x34] sm:$0xf]
    %v474 = vld [vmem:[#allocation8 + $0x38] sm:$0xf]
    %v475 = vld [vmem:[#allocation8 + $0x3c] sm:$0xf]
    %v476 = vld [vmem:[#allocation8 + $0x40] sm:$0xf]
    %v477 = vld [vmem:[#allocation8 + $0x44] sm:$0xf]
    %v478 = vld [vmem:[#allocation8 + $0x48] sm:$0xf]
    %v479 = vld [vmem:[#allocation8 + $0x4c] sm:$0xf]
    %v480 = vld [vmem:[#allocation8 + $0x50] sm:$0xf]
    %v481 = vld [vmem:[#allocation8 + $0x54] sm:$0xf]
    %v482 = vld [vmem:[#allocation8 + $0x58] sm:$0xf]
    %v483 = vld [vmem:[#allocation8 + $0x5c] sm:$0xf]
    %v484 = vld [vmem:[#allocation8 + $0x60] sm:$0xf]
    %v485 = vld [vmem:[#allocation8 + $0x64] sm:$0xf]
    %v486 = vld [vmem:[#allocation8 + $0x68] sm:$0xf]
    %v487 = vld [vmem:[#allocation8 + $0x6c] sm:$0xf]
    %v488 = vld [vmem:[#allocation8 + $0x70] sm:$0xf]
    %v489 = vld [vmem:[#allocation8 + $0x74] sm:$0xf]
    %v490 = vld [vmem:[#allocation8 + $0x78] sm:$0xf]
    %v491 = vld [vmem:[#allocation8 + $0x7c] sm:$0xf]
    %v492 = vld [vmem:[#allocation8 + $0x80] sm:$0xf]
    %v493 = vld [vmem:[#allocation8 + $0x84] sm:$0xf]
    %v494 = vld [vmem:[#allocation8 + $0x88] sm:$0xf]
    %v495 = vld [vmem:[#allocation8 + $0x8c] sm:$0xf]
    %v496 = vld [vmem:[#allocation8 + $0x90] sm:$0xf]
    %v497 = vld [vmem:[#allocation8 + $0x94] sm:$0xf]
    %v498 = vld [vmem:[#allocation8 + $0x98] sm:$0xf]
    %v499 = vld [vmem:[#allocation8 + $0x9c] sm:$0xf]
    %v500 = vld [vmem:[#allocation8 + $0xa0] sm:$0xf]
    %v501 = vld [vmem:[#allocation8 + $0xa4] sm:$0xf]
    %v502 = vld [vmem:[#allocation8 + $0xa8] sm:$0xf]
    %v503 = vld [vmem:[#allocation8 + $0xac] sm:$0xf]
    %v504 = vld [vmem:[#allocation8 + $0xb0] sm:$0xf]
    %v505 = vld [vmem:[#allocation8 + $0xb4] sm:$0xf]
    %v506 = vld [vmem:[#allocation8 + $0xb8] sm:$0xf]
    %v507 = vld [vmem:[#allocation8 + $0xbc] sm:$0xf]
    %v508 = vld [vmem:[#allocation8 + $0xc0] sm:$0xf]
    %v509 = vld [vmem:[#allocation8 + $0xc4] sm:$0xf]
    %v510 = vld [vmem:[#allocation8 + $0xc8] sm:$0xf]
    %v511 = vld [vmem:[#allocation8 + $0xcc] sm:$0xf]
    %v512 = vld [vmem:[#allocation8 + $0xd0] sm:$0xf]
    %v513 = vld [vmem:[#allocation8 + $0xd4] sm:$0xf]
    %v514 = vld [vmem:[#allocation8 + $0xd8] sm:$0xf]
    %v515 = vld [vmem:[#allocation8 + $0xdc] sm:$0xf]
    %v516 = vld [vmem:[#allocation8 + $0xe0] sm:$0xf]
    %v517 = vld [vmem:[#allocation8 + $0xe4] sm:$0xf]
    %v518 = vld [vmem:[#allocation8 + $0xe8] sm:$0xf]
    %v519 = vld [vmem:[#allocation8 + $0xec] sm:$0xf]
    %v520 = vld [vmem:[#allocation8 + $0xf0] sm:$0xf]
    %v521 = vld [vmem:[#allocation8 + $0xf4] sm:$0xf]
    %v522 = vld [vmem:[#allocation8 + $0xf8] sm:$0xf]
    %v523 = vld [vmem:[#allocation8 + $0xfc] sm:$0xf]
    %v524 = vld [vmem:[#allocation8 + $0x100] sm:$0xf]
    %v525 = vld [vmem:[#allocation8 + $0x104] sm:$0xf]
    %v526 = vld [vmem:[#allocation8 + $0x108] sm:$0xf]
    %v527 = vld [vmem:[#allocation8 + $0x10c] sm:$0xf]
    %v528 = vld [vmem:[#allocation8 + $0x110] sm:$0xf]
    %v529 = vld [vmem:[#allocation8 + $0x114] sm:$0xf]
    %v530 = vld [vmem:[#allocation8 + $0x118] sm:$0xf]
    %v531 = vld [vmem:[#allocation8 + $0x11c] sm:$0xf]
    %v532 = vld [vmem:[#allocation8 + $0x120] sm:$0xf]
    %v533 = vld [vmem:[#allocation8 + $0x124] sm:$0xf]
    %v534 = vld [vmem:[#allocation8 + $0x128] sm:$0xf]
    %v535 = vperm.slane %v131, 1
    %v539 = vunpack.c.l.b16 %v457
    %v540 = vunpack.c.h.b16 %v457
    %v541 = vunpack.c.l.b16 %v458
    %v542 = vunpack.c.h.b16 %v458
    %v543 = vunpack.c.l.b16 %v459
    %v544 = vpack.c.b16 %v539, %v539
    %v545 = vpack.c.b16 %v540, %v540
    %v546 = vpack.c.b16 %v541, %v541
    %v547 = vpack.c.b16 %v542, %v542
    %v548 = vpack.c.b16 %v543, %v543
    %v628 = vunpack.c.l.b16 %v460
    %v629 = vunpack.c.l.b16 %v461
    %v630 = vunpack.c.l.b16 %v462
    %v631 = vunpack.c.l.b16 %v463
    %v632 = vunpack.c.l.b16 %v464
    %v633 = vunpack.c.l.b16 %v465
    %v634 = vunpack.c.l.b16 %v466
    %v635 = vunpack.c.l.b16 %v467
    %v636 = vunpack.c.l.b16 %v468
    %v637 = vunpack.c.l.b16 %v469
    %v638 = vunpack.c.l.b16 %v470
    %v639 = vunpack.c.l.b16 %v471
    %v640 = vunpack.c.l.b16 %v472
    %v641 = vunpack.c.l.b16 %v473
    %v642 = vunpack.c.l.b16 %v474
    %v643 = vunpack.c.l.b16 %v475
    %v644 = vunpack.c.l.b16 %v476
    %v645 = vunpack.c.l.b16 %v477
    %v646 = vunpack.c.l.b16 %v478
    %v647 = vunpack.c.l.b16 %v479
    %v648 = vunpack.c.l.b16 %v480
    %v649 = vunpack.c.l.b16 %v481
    %v650 = vunpack.c.l.b16 %v482
    %v651 = vunpack.c.l.b16 %v483
    %v652 = vunpack.c.l.b16 %v484
    %v653 = vunpack.c.l.b16 %v485
    %v654 = vunpack.c.l.b16 %v486
    %v655 = vunpack.c.l.b16 %v487
    %v656 = vunpack.c.l.b16 %v488
    %v657 = vunpack.c.l.b16 %v489
    %v658 = vunpack.c.l.b16 %v490
    %v659 = vunpack.c.l.b16 %v491
    %v660 = vunpack.c.l.b16 %v492
    %v661 = vunpack.c.l.b16 %v493
    %v662 = vunpack.c.l.b16 %v494
    %v663 = vunpack.c.l.b16 %v495
    %v664 = vunpack.c.l.b16 %v496
    %v665 = vunpack.c.l.b16 %v497
    %v666 = vunpack.c.l.b16 %v498
    %v667 = vunpack.c.l.b16 %v499
    %v668 = vunpack.c.l.b16 %v500
    %v669 = vunpack.c.l.b16 %v501
    %v670 = vunpack.c.l.b16 %v502
    %v671 = vunpack.c.l.b16 %v503
    %v672 = vunpack.c.l.b16 %v504
    %v673 = vunpack.c.l.b16 %v505
    %v674 = vunpack.c.l.b16 %v506
    %v675 = vunpack.c.l.b16 %v507
    %v676 = vunpack.c.l.b16 %v508
    %v677 = vunpack.c.l.b16 %v509
    %v678 = vunpack.c.l.b16 %v510
    %v679 = vunpack.c.l.b16 %v511
    %v680 = vunpack.c.l.b16 %v512
    %v681 = vunpack.c.l.b16 %v513
    %v682 = vunpack.c.l.b16 %v514
    %v683 = vunpack.c.l.b16 %v515
    %v684 = vunpack.c.l.b16 %v516
    %v685 = vunpack.c.l.b16 %v517
    %v686 = vunpack.c.l.b16 %v518
    %v687 = vunpack.c.l.b16 %v519
    %v688 = vunpack.c.l.b16 %v520
    %v689 = vunpack.c.l.b16 %v521
    %v690 = vunpack.c.l.b16 %v522
    %v691 = vunpack.c.l.b16 %v523
    %v692 = vunpack.c.l.b16 %v524
    %v693 = vunpack.c.l.b16 %v525
    %v694 = vunpack.c.l.b16 %v526
    %v695 = vunpack.c.l.b16 %v527
    %v696 = vunpack.c.l.b16 %v528
    %v697 = vunpack.c.l.b16 %v529
    %v698 = vunpack.c.l.b16 %v530
    %v699 = vunpack.c.l.b16 %v531
    %v700 = vunpack.c.l.b16 %v532
    %v701 = vunpack.c.l.b16 %v533
    %v702 = vunpack.c.l.b16 %v534
    %v703 = vpack.c.b16 %v629, %v628
    %v704 = vpack.c.b16 %v631, %v630
    %v705 = vpack.c.b16 %v633, %v632
    %v706 = vpack.c.b16 %v635, %v634
    %v707 = vpack.c.b16 %v637, %v636
    %v708 = vpack.c.b16 %v639, %v638
    %v709 = vpack.c.b16 %v641, %v640
    %v710 = vpack.c.b16 %v643, %v642
    %v711 = vpack.c.b16 %v645, %v644
    %v712 = vpack.c.b16 %v647, %v646
    %v713 = vpack.c.b16 %v649, %v648
    %v714 = vpack.c.b16 %v651, %v650
    %v715 = vpack.c.b16 %v653, %v652
    %v716 = vpack.c.b16 %v655, %v654
    %v717 = vpack.c.b16 %v657, %v656
    %v718 = vpack.c.b16 %v659, %v658
    %v719 = vpack.c.b16 %v661, %v660
    %v720 = vpack.c.b16 %v663, %v662
    %v721 = vpack.c.b16 %v665, %v664
    %v722 = vpack.c.b16 %v667, %v666
    %v723 = vpack.c.b16 %v669, %v668
    %v724 = vpack.c.b16 %v671, %v670
    %v725 = vpack.c.b16 %v673, %v672
    %v726 = vpack.c.b16 %v675, %v674
    %v727 = vpack.c.b16 %v677, %v676
    %v728 = vpack.c.b16 %v679, %v678
    %v729 = vpack.c.b16 %v681, %v680
    %v730 = vpack.c.b16 %v683, %v682
    %v731 = vpack.c.b16 %v685, %v684
    %v732 = vpack.c.b16 %v687, %v686
    %v733 = vpack.c.b16 %v689, %v688
    %v734 = vpack.c.b16 %v691, %v690
    %v735 = vpack.c.b16 %v693, %v692
    %v736 = vpack.c.b16 %v695, %v694
    %v737 = vpack.c.b16 %v697, %v696
    %v738 = vpack.c.b16 %v699, %v698
    %v739 = vpack.c.b16 %v701, %v700
    %v740 = vpack.c.b16 %v702, %v702
    %vm778 = vcmask 719872
    %v780 = vsel %vm778, %v548, 0
    %vm782 = vcmask 1043456
    %v784 = vsel %vm782, %v740, 0
    %786 = vmatpush.bf16.msra.mxu0 %v710
    %787 = vmatpush.bf16.msra.mxu0 %v709
    %788 = vmatpush.bf16.msra.mxu0 %v708
    %789 = vmatpush.bf16.msra.mxu0 %v707
    %790 = vmatpush.bf16.msra.mxu0 %v706
    %791 = vmatpush.bf16.msra.mxu0 %v705
    %792 = vmatpush.bf16.msra.mxu0 %v704
    %793 = vmatpush.bf16.msra.mxu0 %v703
    %794 = vmatmul.bf16.gmra.mxu0 %v544
    %v795 = vpop.f32.mrf.mxu0
    %v796 = vadd.f32 %v535, %v795
    %v797 = vpop.f32.mrf.mxu0
    %798 = vdwg.mxu0
    %799 = vmatpush.bf16.msra.mxu0 %v718
    %800 = vmatpush.bf16.msra.mxu0 %v717
    %801 = vmatpush.bf16.msra.mxu0 %v716
    %802 = vmatpush.bf16.msra.mxu0 %v715
    %803 = vmatpush.bf16.msra.mxu0 %v714
    %804 = vmatpush.bf16.msra.mxu0 %v713
    %805 = vmatpush.bf16.msra.mxu0 %v712
    %806 = vmatpush.bf16.msra.mxu0 %v711
    %807 = vmatmul.bf16.gmra.mxu0 %v545
    %v808 = vpop.f32.mrf.mxu0
    %v809 = vadd.f32 %v796, %v808
    %v810 = vpop.f32.mrf.mxu0
    %811 = vdwg.mxu0
    %812 = vmatpush.bf16.msra.mxu0 %v726
    %813 = vmatpush.bf16.msra.mxu0 %v725
    %814 = vmatpush.bf16.msra.mxu0 %v724
    %815 = vmatpush.bf16.msra.mxu0 %v723
    %816 = vmatpush.bf16.msra.mxu0 %v722
    %817 = vmatpush.bf16.msra.mxu0 %v721
    %818 = vmatpush.bf16.msra.mxu0 %v720
    %819 = vmatpush.bf16.msra.mxu0 %v719
    %820 = vmatmul.bf16.gmra.mxu0 %v546
    %v821 = vpop.f32.mrf.mxu0
    %v822 = vadd.f32 %v809, %v821
    %v823 = vpop.f32.mrf.mxu0
    %824 = vdwg.mxu0
    %825 = vmatpush.bf16.msra.mxu0 %v734
    %826 = vmatpush.bf16.msra.mxu0 %v733
    %827 = vmatpush.bf16.msra.mxu0 %v732
    %828 = vmatpush.bf16.msra.mxu0 %v731
    %829 = vmatpush.bf16.msra.mxu0 %v730
    %830 = vmatpush.bf16.msra.mxu0 %v729
    %831 = vmatpush.bf16.msra.mxu0 %v728
    %832 = vmatpush.bf16.msra.mxu0 %v727
    %833 = vmatmul.bf16.gmra.mxu0 %v547
    %v834 = vpop.f32.mrf.mxu0
    %v835 = vadd.f32 %v822, %v834
    %v836 = vpop.f32.mrf.mxu0
    %837 = vdwg.mxu0
    %838 = vmatpush.bf16.msra.mxu0 0
    %839 = vmatpush.bf16.msra.mxu0 0
    %840 = vmatpush.bf16.msra.mxu0 %v784
    %841 = vmatpush.bf16.msra.mxu0 %v739
    %842 = vmatpush.bf16.msra.mxu0 %v738
    %843 = vmatpush.bf16.msra.mxu0 %v737
    %844 = vmatpush.bf16.msra.mxu0 %v736
    %845 = vmatpush.bf16.msra.mxu0 %v735
    %846 = vmatmul.bf16.gmra.mxu0 %v780
    %v847 = vpop.f32.mrf.mxu0
    %v848 = vadd.f32 %v835, %v847
    %v849 = vpop.f32.mrf.mxu0
    %850 = vdwg.mxu0
    %v851 = vpack.c.bf16 %v454, %v454
    %v852 = vld [vmem:[#allocation10] sm:$0xf]
    %v853 = vld [vmem:[#allocation10 + $0x4] sm:$0xf]
    %v854 = vld [vmem:[#allocation10 + $0x8] sm:$0xf]
    %v855 = vld [vmem:[#allocation10 + $0xc] sm:$0xf]
    %v856 = vld [vmem:[#allocation10 + $0x10] sm:$0xf]
    %v857 = vld [vmem:[#allocation10 + $0x14] sm:$0xf]
    %v858 = vld [vmem:[#allocation10 + $0x18] sm:$0xf]
    %v859 = vld [vmem:[#allocation10 + $0x1c] sm:$0xf]
    %v860 = vld [vmem:[#allocation10 + $0x20] sm:$0xf]
    %v861 = vld [vmem:[#allocation10 + $0x24] sm:$0xf]
    %v862 = vld [vmem:[#allocation10 + $0x28] sm:$0xf]
    %v863 = vld [vmem:[#allocation10 + $0x2c] sm:$0xf]
    %v864 = vld [vmem:[#allocation10 + $0x30] sm:$0xf]
    %v865 = vld [vmem:[#allocation10 + $0x34] sm:$0xf]
    %v866 = vld [vmem:[#allocation10 + $0x38] sm:$0xf]
    %v867 = vld [vmem:[#allocation10 + $0x3c] sm:$0xf]
    %v868 = vpack.c.bf16 %v848, %v848
    %v869 = vld [vmem:[#allocation11] sm:$0xf]
    %v870 = vld [vmem:[#allocation11 + $0x4] sm:$0xf]
    %v871 = vld [vmem:[#allocation11 + $0x8] sm:$0xf]
    %v872 = vld [vmem:[#allocation11 + $0xc] sm:$0xf]
    %v873 = vld [vmem:[#allocation11 + $0x10] sm:$0xf]
    %v874 = vld [vmem:[#allocation11 + $0x14] sm:$0xf]
    %v875 = vld [vmem:[#allocation11 + $0x18] sm:$0xf]
    %v876 = vld [vmem:[#allocation11 + $0x1c] sm:$0xf]
    %v877 = vld [vmem:[#allocation11 + $0x20] sm:$0xf]
    %v878 = vld [vmem:[#allocation11 + $0x24] sm:$0xf]
    %v879 = vld [vmem:[#allocation11 + $0x28] sm:$0xf]
    %v880 = vld [vmem:[#allocation11 + $0x2c] sm:$0xf]
    %v881 = vld [vmem:[#allocation11 + $0x30] sm:$0xf]
    %v882 = vld [vmem:[#allocation11 + $0x34] sm:$0xf]
    %v883 = vld [vmem:[#allocation11 + $0x38] sm:$0xf]
    %v884 = vld [vmem:[#allocation11 + $0x3c] sm:$0xf]
    %v901 = vunpack.c.l.b16 %v869
    %v902 = vunpack.c.l.b16 %v870
    %v903 = vunpack.c.l.b16 %v871
    %v904 = vunpack.c.l.b16 %v872
    %v905 = vunpack.c.l.b16 %v873
    %v906 = vunpack.c.l.b16 %v874
    %v907 = vunpack.c.l.b16 %v875
    %v908 = vunpack.c.l.b16 %v876
    %v909 = vunpack.c.l.b16 %v877
    %v910 = vunpack.c.l.b16 %v878
    %v911 = vunpack.c.l.b16 %v879
    %v912 = vunpack.c.l.b16 %v880
    %v913 = vunpack.c.l.b16 %v881
    %v914 = vunpack.c.l.b16 %v882
    %v915 = vunpack.c.l.b16 %v883
    %v916 = vunpack.c.l.b16 %v884
    %v917 = vpack.c.b16 %v902, %v901
    %v918 = vpack.c.b16 %v904, %v903
    %v919 = vpack.c.b16 %v906, %v905
    %v920 = vpack.c.b16 %v908, %v907
    %v921 = vpack.c.b16 %v910, %v909
    %v922 = vpack.c.b16 %v912, %v911
    %v923 = vpack.c.b16 %v914, %v913
    %v924 = vpack.c.b16 %v916, %v915
    %933 = vmatpush.bf16.msra.mxu0 %v924
    %934 = vmatpush.bf16.msra.mxu0 %v923
    %935 = vmatpush.bf16.msra.mxu0 %v922
    %936 = vmatpush.bf16.msra.mxu0 %v921
    %937 = vmatpush.bf16.msra.mxu0 %v920
    %938 = vmatpush.bf16.msra.mxu0 %v919
    %939 = vmatpush.bf16.msra.mxu0 %v918
    %940 = vmatpush.bf16.msra.mxu0 %v917
    %941 = vmatmul.bf16.gmra.mxu0 %v868
    %v942 = vpop.f32.mrf.mxu0
    %v943 = vadd.f32 0.0, %v942
    %v944 = vpop.f32.mrf.mxu0
    %945 = vdwg.mxu0
    %v962 = vunpack.c.l.b16 %v852
    %v963 = vunpack.c.l.b16 %v853
    %v964 = vunpack.c.l.b16 %v854
    %v965 = vunpack.c.l.b16 %v855
    %v966 = vunpack.c.l.b16 %v856
    %v967 = vunpack.c.l.b16 %v857
    %v968 = vunpack.c.l.b16 %v858
    %v969 = vunpack.c.l.b16 %v859
    %v970 = vunpack.c.l.b16 %v860
    %v971 = vunpack.c.l.b16 %v861
    %v972 = vunpack.c.l.b16 %v862
    %v973 = vunpack.c.l.b16 %v863
    %v974 = vunpack.c.l.b16 %v864
    %v975 = vunpack.c.l.b16 %v865
    %v976 = vunpack.c.l.b16 %v866
    %v977 = vunpack.c.l.b16 %v867
    %v978 = vpack.c.b16 %v963, %v962
    %v979 = vpack.c.b16 %v965, %v964
    %v980 = vpack.c.b16 %v967, %v966
    %v981 = vpack.c.b16 %v969, %v968
    %v982 = vpack.c.b16 %v971, %v970
    %v983 = vpack.c.b16 %v973, %v972
    %v984 = vpack.c.b16 %v975, %v974
    %v985 = vpack.c.b16 %v977, %v976
    %994 = vmatpush.bf16.msra.mxu0 %v985
    %995 = vmatpush.bf16.msra.mxu0 %v984
    %996 = vmatpush.bf16.msra.mxu0 %v983
    %997 = vmatpush.bf16.msra.mxu0 %v982
    %998 = vmatpush.bf16.msra.mxu0 %v981
    %999 = vmatpush.bf16.msra.mxu0 %v980
    %1000 = vmatpush.bf16.msra.mxu0 %v979
    %1001 = vmatpush.bf16.msra.mxu0 %v978
    %1002 = vmatmul.bf16.gmra.mxu0 %v851
    %v1003 = vpop.f32.mrf.mxu0
    %v1004 = vadd.f32 %v943, %v1003
    %v1005 = vpop.f32.mrf.mxu0
    %1006 = vdwg.mxu0
    %v1007 = vperm.slane %v131, 2
    %v1008 = vadd.f32 %v1004, %v1007
    %1009 = vst [vmem:[#allocation14] sm:$0xff] %v1008
    // Predicated region
    $region58: #{tpu_custom_call.1} parent=1 // pred_check
      _
    $region59: #{tpu_custom_call.1} parent=1 // pred_check_branch
      %1011 = sbr.rel (0) target = $region61
    $region60: #{tpu_custom_call.1} parent=1 // pred_region
      %1013 = vsyncadd [#allocation4], 0
      %s1015 = sshll.u32 [#allocation14], 4
      %s1016 = int_to_ptr.vmem [resolvable:$true] %s1015
      %s1017 = sshll.u32 %s7, 4
      %s1018 = int_to_ptr.hbm [resolvable:$true] %s1017
      %1020 = dma.vmem_to_hbm [thread:$0]  %s1016, 128, %s1018, [#allocation4]
    $region61: #{tpu_custom_call.1} parent=1 // pred_fallthru
      _
    // Predicated region
    $region62: #{tpu_custom_call.1} parent=1 // pred_check
      _
    $region63: #{tpu_custom_call.1} parent=1 // pred_check_branch
      %1022 = sbr.rel (0) target = $region65
    $region64: #{tpu_custom_call.1} parent=1 // pred_region
      %1024 = dma.done [#allocation4], 128
    $region65: #{tpu_custom_call.1} parent=1 // pred_fallthru
      _
    %1025 = vsyncpa [#allocation3], 1
    %1026 = vsyncpa [#allocation6], 1
    %1027 = vsyncpa [#allocation9], 1
    %1028 = vsyncpa [#allocation12], 1
    %1029 = vsyncpa [#allocation4], 1

</llo_original>
